<compile_context>
chip_gen: v7x
topology: tpu7x:2x2x1
jax: 0.10.0
libtpu: 0.0.40
codegen_flags: <defaults>
</compile_context>

<pallas_src>
import functools

import jax
import jax.numpy as jnp
from jax.experimental import pallas as pl
from jax.experimental.pallas import tpu as pltpu

_LANE = 128          # pad the tiny num_labels=2 output up to a full lane width
_DEFAULT_TILE_N = 512


def _head_kernel(x_ref, w1_ref, b1_ref, w2_ref, b2_ref, o_ref):
    # dense: [T, 2H] @ [2H, H] + [1, H]   (f32 accumulate on the MXU)
    h = jnp.dot(x_ref[...], w1_ref[...], preferred_element_type=jnp.float32)
    h = jnp.tanh(h + b1_ref[...])                      # bias + tanh in f32 (EUP)
    # out_proj (lane-padded): [T, H] @ [H, 128] + [1, 128]
    out = jnp.dot(h, w2_ref[...].astype(jnp.float32),
                  preferred_element_type=jnp.float32)
    out = out + b2_ref[...]
    o_ref[...] = out.astype(o_ref.dtype)


def _round_up(x, m):
    return ((x + m - 1) // m) * m


@functools.partial(jax.jit, static_argnames=("tile_n",))
def roberta_classification_head(x, w1, b1, w2, b2, *, tile_n=_DEFAULT_TILE_N):
    """x: any shape with last dim = hidden_size; reshaped to (-1, 2*hidden).

    w1: (2H, H), b1: (H,), w2: (H, num_labels), b2: (num_labels,)
    (weights stored transposed relative to nn.Linear, i.e. (in, out)).
    """
    hidden = x.shape[-1]
    x2 = x.reshape(-1, hidden * 2)                     # glue reshape (plain JAX)
    n, in_dim = x2.shape
    h_dim = w1.shape[1]
    out_dim = w2.shape[1]

    # --- choose row tile & pad rows so every grid step sees a full tile ------
    if n <= tile_n:
        tile_rows = _round_up(max(n, 1), 8)            # single full-tile grid
        n_pad = tile_rows
    else:
        tile_rows = _round_up(tile_n, 8)
        n_pad = _round_up(n, tile_rows)
    if n_pad != n:
        x2 = jnp.pad(x2, ((0, n_pad - n), (0, 0)))

    # --- lane-dense output: pad num_labels -> 128 ----------------------------
    out_pad = _round_up(out_dim, _LANE)
    w2_p = jnp.pad(w2, ((0, 0), (0, out_pad - out_dim)))
    b2_p = jnp.pad(b2.reshape(1, out_dim), ((0, 0), (0, out_pad - out_dim)))
    b1_2d = b1.reshape(1, h_dim)

    grid = (n_pad // tile_rows,)

    out_padded = pl.pallas_call(
        _head_kernel,
        out_shape=jax.ShapeDtypeStruct((n_pad, out_pad), x2.dtype),
        grid=grid,
        in_specs=[
            pl.BlockSpec((tile_rows, in_dim), lambda i: (i, 0)),   # activations: tiled
            pl.BlockSpec((in_dim, h_dim), lambda i: (0, 0)),       # w1: resident
            pl.BlockSpec((1, h_dim), lambda i: (0, 0)),            # b1: resident
            pl.BlockSpec((h_dim, out_pad), lambda i: (0, 0)),      # w2 (padded): resident
            pl.BlockSpec((1, out_pad), lambda i: (0, 0)),          # b2 (padded): resident
        ],
        out_specs=pl.BlockSpec((tile_rows, out_pad), lambda i: (i, 0)),
        compiler_params=pltpu.CompilerParams(
            dimension_semantics=("parallel",),
            vmem_limit_bytes=64 * 1024 * 1024,
        ),
    )(x2, w1, b1_2d, w2_p, b2_p)

    # strip row / lane padding outside the kernel
    return out_padded[:n, :out_dim]


if __name__ == "__main__":
    hidden = 32       # config.hidden_size (small test shape)
    batch = 4
    # Input consistent with the module: (..., hidden); reshape(-1, 2*hidden)
    # pairs consecutive hidden vectors -> effective x shape (batch, 2, hidden).
    key = jax.random.PRNGKey(0)
    kx, k1, k2, k3, k4 = jax.random.split(key, 5)

    x = jax.random.normal(kx, (batch, 2, hidden), dtype=jnp.float32)

    # Deterministic parameter init (nn.Linear shapes, stored transposed (in, out)).
    w1 = (jax.random.normal(k1, (hidden * 2, hidden), dtype=jnp.float32)
          * (1.0 / jnp.sqrt(hidden * 2)))
    b1 = jax.random.normal(k2, (hidden,), dtype=jnp.float32) * 0.01
    w2 = (jax.random.normal(k3, (hidden, 2), dtype=jnp.float32)
          * (1.0 / jnp.sqrt(hidden)))
    b2 = jax.random.normal(k4, (2,), dtype=jnp.float32) * 0.01

    out = roberta_classification_head(x, w1, b1, w2, b2)
    out = jax.block_until_ready(out)

    # Pure-JAX reference check
    ref = jnp.tanh(x.reshape(-1, hidden * 2) @ w1 + b1) @ w2 + b2
    assert out.shape == (batch, 2), out.shape
    assert jnp.allclose(out, ref, atol=1e-5, rtol=1e-5)

    print("KERNEL_OK")
</pallas_src>

<mosaic_0001>
module attributes {stable_mosaic.version = 11 : i64} {
  func.func @_head_kernel(%arg0: i32, %arg1: memref<8x64xf32, #tpu.memory_space<vmem>>, %arg2: memref<64x32xf32, #tpu.memory_space<vmem>>, %arg3: memref<1x32xf32, #tpu.memory_space<vmem>>, %arg4: memref<32x128xf32, #tpu.memory_space<vmem>>, %arg5: memref<1x128xf32, #tpu.memory_space<vmem>>, %arg6: memref<8x128xf32, #tpu.memory_space<vmem>>) attributes {dimension_semantics = [#tpu.dimension_semantics<parallel>], iteration_bounds = array<i64: 1>, scalar_prefetch = 0 : i64, scratch_operands = 0 : i64, tpu.core_type = #tpu.core_type<tc>, window_params = [{transform_indices = @transform_0, window_bounds = array<i64: 8, 64>}, {pipeline_mode = #tpu.pipeline_mode<synchronous>, transform_indices = @transform_1, window_bounds = array<i64: 64, 32>}, {pipeline_mode = #tpu.pipeline_mode<synchronous>, transform_indices = @transform_2, window_bounds = array<i64: 1, 32>}, {pipeline_mode = #tpu.pipeline_mode<synchronous>, transform_indices = @transform_3, window_bounds = array<i64: 32, 128>}, {pipeline_mode = #tpu.pipeline_mode<synchronous>, transform_indices = @transform_4, window_bounds = array<i64: 1, 128>}, {transform_indices = @transform_5, window_bounds = array<i64: 8, 128>}]} {
    %c0 = arith.constant 0 : index
    %c0_0 = arith.constant 0 : index
    %0 = vector.load %arg1[%c0, %c0_0] : memref<8x64xf32, #tpu.memory_space<vmem>>, vector<8x64xf32>
    %c0_1 = arith.constant 0 : index
    %c0_2 = arith.constant 0 : index
    %1 = vector.load %arg2[%c0_1, %c0_2] : memref<64x32xf32, #tpu.memory_space<vmem>>, vector<64x32xf32>
    %cst = arith.constant dense<0.000000e+00> : vector<8x32xf32>
    %2 = tpu.matmul %0, %1, %cst {dimension_numbers = #tpu.dot_dimension_numbers<[1], [0], [0], [1], [0, 0, 1, 1], [], []>} : vector<8x64xf32>, vector<64x32xf32>, vector<8x32xf32> -> vector<8x32xf32>
    %c0_3 = arith.constant 0 : index
    %c0_4 = arith.constant 0 : index
    %3 = vector.load %arg3[%c0_3, %c0_4] : memref<1x32xf32, #tpu.memory_space<vmem>>, vector<1x32xf32>
    %4 = vector.broadcast %3 : vector<1x32xf32> to vector<8x32xf32>
    %5 = arith.addf %2, %4 : vector<8x32xf32>
    %6 = math.tanh %5 : vector<8x32xf32>
    %c0_5 = arith.constant 0 : index
    %c0_6 = arith.constant 0 : index
    %7 = vector.load %arg4[%c0_5, %c0_6] : memref<32x128xf32, #tpu.memory_space<vmem>>, vector<32x128xf32>
    %cst_7 = arith.constant dense<0.000000e+00> : vector<8x128xf32>
    %8 = tpu.matmul %6, %7, %cst_7 {dimension_numbers = #tpu.dot_dimension_numbers<[1], [0], [0], [1], [0, 0, 1, 1], [], []>} : vector<8x32xf32>, vector<32x128xf32>, vector<8x128xf32> -> vector<8x128xf32>
    %c0_8 = arith.constant 0 : index
    %c0_9 = arith.constant 0 : index
    %9 = vector.load %arg5[%c0_8, %c0_9] : memref<1x128xf32, #tpu.memory_space<vmem>>, vector<1x128xf32>
    %10 = vector.broadcast %9 : vector<1x128xf32> to vector<8x128xf32>
    %11 = arith.addf %8, %10 : vector<8x128xf32>
    %c0_10 = arith.constant 0 : index
    %c0_11 = arith.constant 0 : index
    %12 = vector.load %arg6[%c0_10, %c0_11] : memref<8x128xf32, #tpu.memory_space<vmem>>, vector<8x128xf32>
    tpu.vector_store %arg6[%c0_10, %c0_11], %11 {strides = array<i32>} : memref<8x128xf32, #tpu.memory_space<vmem>>, vector<8x128xf32>,
    return
  }
  func.func @transform_0(%arg0: i32) -> (i32, i32) {
    %c0_i32 = arith.constant 0 : i32
    %c0_i32_0 = arith.constant 0 : i32
    return %arg0, %c0_i32 : i32, i32
  }
  func.func @transform_1(%arg0: i32) -> (i32, i32) {
    %c0_i32 = arith.constant 0 : i32
    %c0_i32_0 = arith.constant 0 : i32
    %c0_i32_1 = arith.constant 0 : i32
    return %c0_i32, %c0_i32_0 : i32, i32
  }
  func.func @transform_2(%arg0: i32) -> (i32, i32) {
    %c0_i32 = arith.constant 0 : i32
    %c0_i32_0 = arith.constant 0 : i32
    %c0_i32_1 = arith.constant 0 : i32
    return %c0_i32, %c0_i32_0 : i32, i32
  }
  func.func @transform_3(%arg0: i32) -> (i32, i32) {
    %c0_i32 = arith.constant 0 : i32
    %c0_i32_0 = arith.constant 0 : i32
    %c0_i32_1 = arith.constant 0 : i32
    return %c0_i32, %c0_i32_0 : i32, i32
  }
  func.func @transform_4(%arg0: i32) -> (i32, i32) {
    %c0_i32 = arith.constant 0 : i32
    %c0_i32_0 = arith.constant 0 : i32
    %c0_i32_1 = arith.constant 0 : i32
    return %c0_i32, %c0_i32_0 : i32, i32
  }
  func.func @transform_5(%arg0: i32) -> (i32, i32) {
    %c0_i32 = arith.constant 0 : i32
    %c0_i32_0 = arith.constant 0 : i32
    return %arg0, %c0_i32 : i32, i32
  }
}

</mosaic_0001>

<llo_original>
// kernel: roberta_classification_head.1
$region0: #{roberta_classification_head.1}
  #allocation0 [shape = 'u32[]', space=smem, size = 0x4, offset = 0x4, fixed_abs, tag = 'smem constant byte address 0x4 - core index']
  #allocation1 [shape = 'u32[144,128]{1,0:T(1,128)}', space=vmem, size = 0x12000, scoped, tag = 'internal scratch']
  %s0 = inlined_call_operand.hbm [shape: f32[8,64], index: 0, kind: input, shape index: {}]
  %s1 = inlined_call_operand.hbm [shape: f32[64,32], index: 1, kind: input, shape index: {}]
  %s2 = inlined_call_operand.hbm [shape: f32[1,32], index: 2, kind: input, shape index: {}]
  %s3 = inlined_call_operand.hbm [shape: f32[32,128], index: 3, kind: input, shape index: {}]
  %s4 = inlined_call_operand.hbm [shape: f32[1,128], index: 4, kind: input, shape index: {}]
  %s5 = inlined_call_operand.hbm [shape: f32[8,128], index: 5, kind: output, shape index: {}]
  %s6 = sld [smem:[#allocation0]]
  $region50: #{roberta_classification_head.1} parent=0
    _
  %s8 = ssub.s32 1, %s6
  %s9 = scalar_select 0, %s8, %s6
  $region1: #{roberta_classification_head.1} parent=0
    #allocation2 [shape = 'u8[4096]{0}', space=vmem, size = 0x1000, scoped, tag = 'input window, operand 0, single buffered']
    #allocation3 [shape = 's32[1]{0}', space=sflag, size = 0x4, scoped, tag = 'scoped memory for roberta_classification_head.1']
    #allocation4 [shape = 's32[1]{0}', space=sflag, size = 0x4, scoped, tag = 'scoped memory for roberta_classification_head.1']
    #allocation5 [shape = 'u8[32768]{0}', space=vmem, size = 0x8000, scoped, tag = 'input window, operand 1, single buffered']
    #allocation6 [shape = 's32[1]{0}', space=sflag, size = 0x4, scoped, tag = 'scoped memory for roberta_classification_head.1']
    #allocation7 [shape = 'u8[512]{0}', space=vmem, size = 0x400, scoped, tag = 'input window, operand 2, single buffered']
    #allocation8 [shape = 'u8[16384]{0}', space=vmem, size = 0x4000, scoped, tag = 'input window, operand 3, single buffered']
    #allocation9 [shape = 's32[1]{0}', space=sflag, size = 0x4, scoped, tag = 'scoped memory for roberta_classification_head.1']
    #allocation10 [shape = 'u8[512]{0}', space=vmem, size = 0x400, scoped, tag = 'input window, operand 4, single buffered']
    #allocation11 [shape = 'u8[4096]{0}', space=vmem, size = 0x1000, scoped, tag = 'output window, operand 0, single buffered']
    %10 = vsyncpa [#allocation3], 0
    %11 = vsyncpa [#allocation6], 0
    %12 = vsyncpa [#allocation9], 0
    %13 = vsyncpa [#allocation4], 0
    // Predicated region
    $region2: #{roberta_classification_head.1} parent=1 // pred_check
      _
    $region3: #{roberta_classification_head.1} parent=1 // pred_check_branch
      %15 = sbr.rel (0) target = $region5
    $region4: #{roberta_classification_head.1} parent=1 // pred_region
      %s17 = ssub.s32 128, 128
      %18 = vsyncadd [#allocation3], %s17
      %s20 = sshll.u32 [#allocation2], 4
      %s21 = int_to_ptr.vmem [resolvable:$true] %s20
      %23 = dma.hbm_to_vmem [thread:$0]  %s0, 128, %s21, [#allocation3]
    $region5: #{roberta_classification_head.1} parent=1 // pred_fallthru
      _
    // Predicated region
    $region6: #{roberta_classification_head.1} parent=1 // pred_check
      _
    $region7: #{roberta_classification_head.1} parent=1 // pred_check_branch
      %25 = sbr.rel (0) target = $region9
    $region8: #{roberta_classification_head.1} parent=1 // pred_region
      %s27 = ssub.s32 1024, 1024
      %28 = vsyncadd [#allocation6], %s27
      %s29 = sshll.u32 [#allocation5], 4
      %s30 = int_to_ptr.vmem [resolvable:$true] %s29
      %35 = dma.hbm_to_vmem [thread:$0]  %s1, 1024, %s30, [#allocation6], 128, 128, 8
    $region9: #{roberta_classification_head.1} parent=1 // pred_fallthru
      _
    // Predicated region
    $region10: #{roberta_classification_head.1} parent=1 // pred_check
      _
    $region11: #{roberta_classification_head.1} parent=1 // pred_check_branch
      %37 = sbr.rel (0) target = $region13
    $region12: #{roberta_classification_head.1} parent=1 // pred_region
      %s39 = ssub.s32 16, 16
      %40 = vsyncadd [#allocation6], %s39
      %s42 = sshll.u32 [#allocation7], 4
      %s43 = int_to_ptr.vmem [resolvable:$true] %s42
      %45 = dma.hbm_to_vmem [thread:$0]  %s2, 16, %s43, [#allocation6]
    $region13: #{roberta_classification_head.1} parent=1 // pred_fallthru
      _
    // Predicated region
    $region14: #{roberta_classification_head.1} parent=1 // pred_check
      _
    $region15: #{roberta_classification_head.1} parent=1 // pred_check_branch
      %47 = sbr.rel (0) target = $region17
    $region16: #{roberta_classification_head.1} parent=1 // pred_region
      %s49 = ssub.s32 512, 512
      %50 = vsyncadd [#allocation9], %s49
      %s51 = sshll.u32 [#allocation8], 4
      %s52 = int_to_ptr.vmem [resolvable:$true] %s51
      %57 = dma.hbm_to_vmem [thread:$0]  %s3, 512, %s52, [#allocation9], 128, 128, 8
    $region17: #{roberta_classification_head.1} parent=1 // pred_fallthru
      _
    // Predicated region
    $region18: #{roberta_classification_head.1} parent=1 // pred_check
      _
    $region19: #{roberta_classification_head.1} parent=1 // pred_check_branch
      %59 = sbr.rel (0) target = $region21
    $region20: #{roberta_classification_head.1} parent=1 // pred_region
      %s61 = ssub.s32 16, 16
      %62 = vsyncadd [#allocation9], %s61
      %s64 = sshll.u32 [#allocation10], 4
      %s65 = int_to_ptr.vmem [resolvable:$true] %s64
      %67 = dma.hbm_to_vmem [thread:$0]  %s4, 16, %s65, [#allocation9]
    $region21: #{roberta_classification_head.1} parent=1 // pred_fallthru
      _
    // Predicated region
    $region22: #{roberta_classification_head.1} parent=1 // pred_check
      _
    $region23: #{roberta_classification_head.1} parent=1 // pred_check_branch
      %69 = sbr.rel (0) target = $region25
    $region24: #{roberta_classification_head.1} parent=1 // pred_region
      %70 = dma.done [#allocation3], 128
    $region25: #{roberta_classification_head.1} parent=1 // pred_fallthru
      _
    // Predicated region
    $region26: #{roberta_classification_head.1} parent=1 // pred_check
      _
    $region27: #{roberta_classification_head.1} parent=1 // pred_check_branch
      %72 = sbr.rel (0) target = $region29
    $region28: #{roberta_classification_head.1} parent=1 // pred_region
      %73 = dma.done [#allocation6], 1024
    $region29: #{roberta_classification_head.1} parent=1 // pred_fallthru
      _
    // Predicated region
    $region30: #{roberta_classification_head.1} parent=1 // pred_check
      _
    $region31: #{roberta_classification_head.1} parent=1 // pred_check_branch
      %75 = sbr.rel (0) target = $region33
    $region32: #{roberta_classification_head.1} parent=1 // pred_region
      %76 = dma.done [#allocation6], 16
    $region33: #{roberta_classification_head.1} parent=1 // pred_fallthru
      _
    // Predicated region
    $region34: #{roberta_classification_head.1} parent=1 // pred_check
      _
    $region35: #{roberta_classification_head.1} parent=1 // pred_check_branch
      %78 = sbr.rel (0) target = $region37
    $region36: #{roberta_classification_head.1} parent=1 // pred_region
      %79 = dma.done [#allocation9], 512
    $region37: #{roberta_classification_head.1} parent=1 // pred_fallthru
      _
    // Predicated region
    $region38: #{roberta_classification_head.1} parent=1 // pred_check
      _
    $region39: #{roberta_classification_head.1} parent=1 // pred_check_branch
      %81 = sbr.rel (0) target = $region41
    $region40: #{roberta_classification_head.1} parent=1 // pred_region
      %82 = dma.done [#allocation9], 16
    $region41: #{roberta_classification_head.1} parent=1 // pred_fallthru
      _
    %v83 = vld [vmem:[#allocation2] sm:$0xff]
    %v84 = vld [vmem:[#allocation5] sm:$0xff]
    %v85 = vld [vmem:[#allocation5 + $0x8] sm:$0xff]
    %v86 = vld [vmem:[#allocation5 + $0x10] sm:$0xff]
    %v87 = vld [vmem:[#allocation5 + $0x18] sm:$0xff]
    %v88 = vld [vmem:[#allocation5 + $0x20] sm:$0xff]
    %v89 = vld [vmem:[#allocation5 + $0x28] sm:$0xff]
    %v90 = vld [vmem:[#allocation5 + $0x30] sm:$0xff]
    %v91 = vld [vmem:[#allocation5 + $0x38] sm:$0xff]
    %v92 = vld [vmem:[#allocation7] sm:$0x1]
    %v94 = vlaneseq
    %v95 = vshrl.u32 %v94, 7
    %v96 = vsub.s32 0, %v95
    %v97 = vrot.slane %v92, %v96
    %vm99 = vcmask 523264
    %v101 = vsel %vm99, %v83, 0
    %103 = vmatprep.subr.mxu0 0.0
    %104 = vmatpush1.msra.mxu0 %v84
    %105 = vmatprep.subr.mxu0 0.0
    %106 = vmatpush1.msra.mxu0 %v85
    %107 = vmatprep.subr.mxu0 0.0
    %108 = vmatpush1.msra.mxu0 %v86
    %109 = vmatprep.subr.mxu0 0.0
    %110 = vmatpush1.msra.mxu0 %v87
    %111 = vmatprep.subr.mxu0 0.0
    %112 = vmatpush1.msra.mxu0 %v88
    %113 = vmatprep.subr.mxu0 0.0
    %114 = vmatpush1.msra.mxu0 %v89
    %115 = vmatprep.subr.mxu0 0.0
    %116 = vmatpush1.msra.mxu0 %v90
    %117 = vmatprep.subr.mxu0 0.0
    %118 = vmatpush1.msra.mxu0 %v91
    %119 = vmatprep.subr.mxu0 0.0
    %120 = vmatpush1.msra.mxu0 0.0
    %121 = vmatprep.subr.mxu0 0.0
    %122 = vmatpush1.msra.mxu0 0.0
    %123 = vmatprep.subr.mxu0 0.0
    %124 = vmatpush1.msra.mxu0 0.0
    %125 = vmatprep.subr.mxu0 0.0
    %126 = vmatpush1.msra.mxu0 0.0
    %127 = vmatprep.subr.mxu0 0.0
    %128 = vmatpush1.msra.mxu0 0.0
    %129 = vmatprep.subr.mxu0 0.0
    %130 = vmatpush1.msra.mxu0 0.0
    %131 = vmatprep.subr.mxu0 0.0
    %132 = vmatpush1.msra.mxu0 0.0
    %133 = vmatprep.subr.mxu0 0.0
    %134 = vmatpush1.msra.mxu0 0.0
    %135 = vmatprep.subr.mxu0 0.0
    %136 = vmatpush1.msra.mxu0 0.0
    %137 = vmatprep.subr.mxu0 0.0
    %138 = vmatpush1.msra.mxu0 0.0
    %139 = vmatprep.subr.mxu0 0.0
    %140 = vmatpush1.msra.mxu0 0.0
    %141 = vmatprep.subr.mxu0 0.0
    %142 = vmatpush1.msra.mxu0 0.0
    %143 = vmatprep.subr.mxu0 0.0
    %144 = vmatpush1.msra.mxu0 0.0
    %145 = vmatprep.subr.mxu0 0.0
    %146 = vmatpush1.msra.mxu0 0.0
    %147 = vmatprep.subr.mxu0 0.0
    %148 = vmatpush1.msra.mxu0 0.0
    %149 = vmatprep.subr.mxu0 0.0
    %150 = vmatpush1.msra.mxu0 0.0
    %151 = vmatprep.subr.mxu0 0.0
    %152 = vmatpush1.msra.mxu0 0.0
    %153 = vmatprep.subr.mxu0 0.0
    %154 = vmatpush1.msra.mxu0 0.0
    %155 = vmatprep.subr.mxu0 0.0
    %156 = vmatpush1.msra.mxu0 0.0
    %157 = vmatprep.subr.mxu0 0.0
    %158 = vmatpush1.msra.mxu0 0.0
    %159 = vmatprep.subr.mxu0 0.0
    %160 = vmatpush1.msra.mxu0 0.0
    %161 = vmatprep.subr.mxu0 0.0
    %162 = vmatpush1.msra.mxu0 0.0
    %163 = vmatprep.subr.mxu0 0.0
    %164 = vmatpush1.msra.mxu0 0.0
    %165 = vmatprep.subr.mxu0 0.0
    %166 = vmatpush1.msra.mxu0 0.0
    %167 = vmatprep.mubr.f32.mxu0 0.0
    %168 = vmatmul.mubr.f32.gmra.mrb[0].mxu0 %v101
    %v169 = vpop.f32.mrb[0].mxu0
    %v170 = vadd.f32 %v97, %v169
    %v171 = vpop.f32.mrb[0].mxu0
    %172 = vdwg.mxu0
    %v173 = vtanh.pop %v170
    %v174 = vld [vmem:[#allocation8] sm:$0xff]
    %v175 = vld [vmem:[#allocation8 + $0x8] sm:$0xff]
    %v176 = vld [vmem:[#allocation8 + $0x10] sm:$0xff]
    %v177 = vld [vmem:[#allocation8 + $0x18] sm:$0xff]
    %v178 = vld [vmem:[#allocation10] sm:$0x1]
    %v180 = vlaneseq
    %v181 = vshrl.u32 %v180, 7
    %v182 = vsub.s32 0, %v181
    %v183 = vrot.slane %v178, %v182
    %vm185 = vcmask 261120
    %v187 = vsel %vm185, %v173, 0
    %189 = vmatprep.subr.mxu0 0.0
    %190 = vmatpush1.msra.mxu0 %v174
    %191 = vmatprep.subr.mxu0 0.0
    %192 = vmatpush1.msra.mxu0 %v175
    %193 = vmatprep.subr.mxu0 0.0
    %194 = vmatpush1.msra.mxu0 %v176
    %195 = vmatprep.subr.mxu0 0.0
    %196 = vmatpush1.msra.mxu0 %v177
    %197 = vmatprep.subr.mxu0 0.0
    %198 = vmatpush1.msra.mxu0 0.0
    %199 = vmatprep.subr.mxu0 0.0
    %200 = vmatpush1.msra.mxu0 0.0
    %201 = vmatprep.subr.mxu0 0.0
    %202 = vmatpush1.msra.mxu0 0.0
    %203 = vmatprep.subr.mxu0 0.0
    %204 = vmatpush1.msra.mxu0 0.0
    %205 = vmatprep.subr.mxu0 0.0
    %206 = vmatpush1.msra.mxu0 0.0
    %207 = vmatprep.subr.mxu0 0.0
    %208 = vmatpush1.msra.mxu0 0.0
    %209 = vmatprep.subr.mxu0 0.0
    %210 = vmatpush1.msra.mxu0 0.0
    %211 = vmatprep.subr.mxu0 0.0
    %212 = vmatpush1.msra.mxu0 0.0
    %213 = vmatprep.subr.mxu0 0.0
    %214 = vmatpush1.msra.mxu0 0.0
    %215 = vmatprep.subr.mxu0 0.0
    %216 = vmatpush1.msra.mxu0 0.0
    %217 = vmatprep.subr.mxu0 0.0
    %218 = vmatpush1.msra.mxu0 0.0
    %219 = vmatprep.subr.mxu0 0.0
    %220 = vmatpush1.msra.mxu0 0.0
    %221 = vmatprep.subr.mxu0 0.0
    %222 = vmatpush1.msra.mxu0 0.0
    %223 = vmatprep.subr.mxu0 0.0
    %224 = vmatpush1.msra.mxu0 0.0
    %225 = vmatprep.subr.mxu0 0.0
    %226 = vmatpush1.msra.mxu0 0.0
    %227 = vmatprep.subr.mxu0 0.0
    %228 = vmatpush1.msra.mxu0 0.0
    %229 = vmatprep.subr.mxu0 0.0
    %230 = vmatpush1.msra.mxu0 0.0
    %231 = vmatprep.subr.mxu0 0.0
    %232 = vmatpush1.msra.mxu0 0.0
    %233 = vmatprep.subr.mxu0 0.0
    %234 = vmatpush1.msra.mxu0 0.0
    %235 = vmatprep.subr.mxu0 0.0
    %236 = vmatpush1.msra.mxu0 0.0
    %237 = vmatprep.subr.mxu0 0.0
    %238 = vmatpush1.msra.mxu0 0.0
    %239 = vmatprep.subr.mxu0 0.0
    %240 = vmatpush1.msra.mxu0 0.0
    %241 = vmatprep.subr.mxu0 0.0
    %242 = vmatpush1.msra.mxu0 0.0
    %243 = vmatprep.subr.mxu0 0.0
    %244 = vmatpush1.msra.mxu0 0.0
    %245 = vmatprep.subr.mxu0 0.0
    %246 = vmatpush1.msra.mxu0 0.0
    %247 = vmatprep.subr.mxu0 0.0
    %248 = vmatpush1.msra.mxu0 0.0
    %249 = vmatprep.subr.mxu0 0.0
    %250 = vmatpush1.msra.mxu0 0.0
    %251 = vmatprep.subr.mxu0 0.0
    %252 = vmatpush1.msra.mxu0 0.0
    %253 = vmatprep.mubr.f32.mxu0 0.0
    %254 = vmatmul.mubr.f32.gmra.mrb[0].mxu0 %v187
    %v255 = vpop.f32.mrb[0].mxu0
    %v256 = vadd.f32 %v183, %v255
    %v257 = vpop.f32.mrb[0].mxu0
    %258 = vdwg.mxu0
    %259 = vst [vmem:[#allocation11] sm:$0xff] %v256
    // Predicated region
    $region42: #{roberta_classification_head.1} parent=1 // pred_check
      _
    $region43: #{roberta_classification_head.1} parent=1 // pred_check_branch
      %261 = sbr.rel (0) target = $region45
    $region44: #{roberta_classification_head.1} parent=1 // pred_region
      %s263 = ssub.s32 128, 128
      %264 = vsyncadd [#allocation4], %s263
      %s266 = sshll.u32 [#allocation11], 4
      %s267 = int_to_ptr.vmem [resolvable:$true] %s266
      %269 = dma.vmem_to_hbm [thread:$0]  %s267, 128, %s5, [#allocation4]
    $region45: #{roberta_classification_head.1} parent=1 // pred_fallthru
      _
    // Predicated region
    $region46: #{roberta_classification_head.1} parent=1 // pred_check
      _
    $region47: #{roberta_classification_head.1} parent=1 // pred_check_branch
      %271 = sbr.rel (0) target = $region49
    $region48: #{roberta_classification_head.1} parent=1 // pred_region
      %272 = dma.done [#allocation4], 128
    $region49: #{roberta_classification_head.1} parent=1 // pred_fallthru
      _
    %273 = vsyncpa [#allocation3], 1
    %274 = vsyncpa [#allocation6], 1
    %275 = vsyncpa [#allocation9], 1
    %276 = vsyncpa [#allocation4], 1

</llo_original>
